<compile_context>
chip_gen: v7x
topology: tpu7x:2x2x1
jax: 0.10.0
libtpu: 0.0.40
codegen_flags: <defaults>
</compile_context>

<pallas_src>
import functools

import jax
import jax.numpy as jnp
from jax import lax
from jax.experimental import pallas as pl
from jax.experimental.pallas import tpu as pltpu

LOG_STD_MAX = 2.0
LOG_STD_MIN = -5.0
HIDDEN = 64

# MIN + 0.5*(MAX-MIN)*(t+1)  ==  t*C1 + C2
_C1 = 0.5 * (LOG_STD_MAX - LOG_STD_MIN)
_C2 = LOG_STD_MIN + _C1


def _round_up(x, m):
    return (x + m - 1) // m * m


def sac_actor_kernel(state_ref, w1_ref, b1_ref, w2_ref, b2_ref,
                     wh_ref, bh_ref, out_ref, *, action_dim):
    x = state_ref[...]                                                    # (tm, S)

    # fc1 + ReLU
    h1 = jnp.dot(x, w1_ref[...], preferred_element_type=jnp.float32) + b1_ref[...]
    h1 = jnp.maximum(h1, 0.0)                                             # (tm, 64)

    # fc2 + ReLU
    h2 = jnp.dot(h1, w2_ref[...], preferred_element_type=jnp.float32) + b2_ref[...]
    h2 = jnp.maximum(h2, 0.0)                                             # (tm, 64)

    # fused head: columns [0:A) = mean, [A:2A) = log_std (pre-tanh), rest zero pad.
    head = jnp.dot(h2, wh_ref[...], preferred_element_type=jnp.float32) + bh_ref[...]

    # tanh + affine only on the log_std columns (tanh runs on the EUP slot; the
    # select is one VPU op; rescale is a single fused multiply-add).
    col = lax.broadcasted_iota(jnp.int32, head.shape, 1)
    is_logstd = (col >= action_dim) & (col < 2 * action_dim)
    rescaled = jnp.tanh(head) * _C1 + _C2
    out = jnp.where(is_logstd, rescaled, head)

    out_ref[...] = out.astype(out_ref.dtype)                              # (tm, 128)


def sac_actor_forward(state, params, *, block_rows=512):
    """state: (B, state_dim) f32. params: dict of weights/biases (see init_params).

    Returns (mean, log_std), each (B, action_dim) f32.
    """
    B, S = state.shape
    A = params["wm"].shape[1]
    assert params["w1"].shape == (S, HIDDEN)

    # Fuse the two heads into a single lane-dense (HIDDEN, n_head) weight/bias,
    # zero-padded up to a multiple of 128 lanes.
    head_w = jnp.concatenate([params["wm"], params["wl"]], axis=1)        # (64, 2A)
    head_b = jnp.concatenate([params["bm"], params["bl"]], axis=1)        # (1, 2A)
    n_head = _round_up(max(2 * A, 1), 128)
    head_w = jnp.pad(head_w, ((0, 0), (0, n_head - 2 * A)))
    head_b = jnp.pad(head_b, ((0, 0), (0, n_head - 2 * A)))

    # Batch tile: multiple of 8 sublanes, capped at block_rows; pad rows so the
    # grid divides evenly (padded rows are sliced off below).
    tm = min(_round_up(B, 8), block_rows)
    Bp = _round_up(B, tm)
    if Bp != B:
        state = jnp.pad(state, ((0, Bp - B), (0, 0)))

    kernel = functools.partial(sac_actor_kernel, action_dim=A)

    out = pl.pallas_call(
        kernel,
        out_shape=jax.ShapeDtypeStruct((Bp, n_head), jnp.float32),
        grid_spec=pltpu.PrefetchScalarGridSpec(
            num_scalar_prefetch=0,
            grid=(Bp // tm,),
            in_specs=[
                pl.BlockSpec((tm, S), lambda i: (i, 0)),            # state: tiled rows
                pl.BlockSpec((S, HIDDEN), lambda i: (0, 0)),        # w1: resident
                pl.BlockSpec((1, HIDDEN), lambda i: (0, 0)),        # b1
                pl.BlockSpec((HIDDEN, HIDDEN), lambda i: (0, 0)),   # w2
                pl.BlockSpec((1, HIDDEN), lambda i: (0, 0)),        # b2
                pl.BlockSpec((HIDDEN, n_head), lambda i: (0, 0)),   # fused head W
                pl.BlockSpec((1, n_head), lambda i: (0, 0)),        # fused head b
            ],
            out_specs=pl.BlockSpec((tm, n_head), lambda i: (i, 0)),
        ),
        compiler_params=pltpu.CompilerParams(
            dimension_semantics=("parallel",),
        ),
    )(state, params["w1"], params["b1"], params["w2"], params["b2"],
      head_w, head_b)

    mean = out[:B, :A]
    log_std = out[:B, A:2 * A]
    return mean, log_std


def init_params(key, state_dim, action_dim):
    """Deterministic init mirroring PyTorch nn.Linear default (uniform +-1/sqrt(fan_in)).
    Weights are stored transposed relative to PyTorch: (in_features, out_features)."""
    def linear(key, fan_in, fan_out):
        kw, kb = jax.random.split(key)
        bound = 1.0 / jnp.sqrt(jnp.float32(fan_in))
        w = jax.random.uniform(kw, (fan_in, fan_out), jnp.float32, -bound, bound)
        b = jax.random.uniform(kb, (1, fan_out), jnp.float32, -bound, bound)
        return w, b

    k1, k2, k3, k4 = jax.random.split(key, 4)
    w1, b1 = linear(k1, state_dim, HIDDEN)
    w2, b2 = linear(k2, HIDDEN, HIDDEN)
    wm, bm = linear(k3, HIDDEN, action_dim)
    wl, bl = linear(k4, HIDDEN, action_dim)
    return dict(w1=w1, b1=b1, w2=w2, b2=b2, wm=wm, bm=bm, wl=wl, bl=bl)


def reference_forward(state, params):
    """Pure-JAX reference for correctness checking."""
    h1 = jnp.maximum(state @ params["w1"] + params["b1"], 0.0)
    h2 = jnp.maximum(h1 @ params["w2"] + params["b2"], 0.0)
    mean = h2 @ params["wm"] + params["bm"]
    ls = jnp.tanh(h2 @ params["wl"] + params["bl"])
    ls = LOG_STD_MIN + 0.5 * (LOG_STD_MAX - LOG_STD_MIN) * (ls + 1.0)
    return mean, ls


if __name__ == "__main__":
    state_dim = 8
    action_dim = 4

    key = jax.random.PRNGKey(0)
    kp, kx1, kx2 = jax.random.split(key, 3)
    params = init_params(kp, state_dim, action_dim)

    # Small (single grid step) case.
    batch = 8
    state = jax.random.normal(kx1, (batch, state_dim), jnp.float32)
    mean, log_std = sac_actor_forward(state, params)
    jax.block_until_ready((mean, log_std))
    mean_ref, log_std_ref = reference_forward(state, params)
    assert mean.shape == (batch, action_dim)
    assert log_std.shape == (batch, action_dim)
    assert jnp.allclose(mean, mean_ref, atol=1e-5, rtol=1e-5)
    assert jnp.allclose(log_std, log_std_ref, atol=1e-5, rtol=1e-5)

    # Larger case exercising the batch grid + row padding path.
    batch2 = 600
    state2 = jax.random.normal(kx2, (batch2, state_dim), jnp.float32)
    mean2, log_std2 = sac_actor_forward(state2, params, block_rows=256)
    jax.block_until_ready((mean2, log_std2))
    mean2_ref, log_std2_ref = reference_forward(state2, params)
    assert mean2.shape == (batch2, action_dim)
    assert log_std2.shape == (batch2, action_dim)
    assert jnp.allclose(mean2, mean2_ref, atol=1e-5, rtol=1e-5)
    assert jnp.allclose(log_std2, log_std2_ref, atol=1e-5, rtol=1e-5)

    print("KERNEL_OK")
</pallas_src>

<mosaic_0001>
module attributes {stable_mosaic.version = 11 : i64} {
  func.func @sac_actor_kernel(%arg0: i32, %arg1: memref<8x8xf32, #tpu.memory_space<vmem>>, %arg2: memref<8x64xf32, #tpu.memory_space<vmem>>, %arg3: memref<1x64xf32, #tpu.memory_space<vmem>>, %arg4: memref<64x64xf32, #tpu.memory_space<vmem>>, %arg5: memref<1x64xf32, #tpu.memory_space<vmem>>, %arg6: memref<64x128xf32, #tpu.memory_space<vmem>>, %arg7: memref<1x128xf32, #tpu.memory_space<vmem>>, %arg8: memref<8x128xf32, #tpu.memory_space<vmem>>) attributes {dimension_semantics = [#tpu.dimension_semantics<parallel>], iteration_bounds = array<i64: 1>, scalar_prefetch = 0 : i64, scratch_operands = 0 : i64, tpu.core_type = #tpu.core_type<tc>, window_params = [{transform_indices = @transform_0, window_bounds = array<i64: 8, 8>}, {pipeline_mode = #tpu.pipeline_mode<synchronous>, transform_indices = @transform_1, window_bounds = array<i64: 8, 64>}, {pipeline_mode = #tpu.pipeline_mode<synchronous>, transform_indices = @transform_2, window_bounds = array<i64: 1, 64>}, {pipeline_mode = #tpu.pipeline_mode<synchronous>, transform_indices = @transform_3, window_bounds = array<i64: 64, 64>}, {pipeline_mode = #tpu.pipeline_mode<synchronous>, transform_indices = @transform_4, window_bounds = array<i64: 1, 64>}, {pipeline_mode = #tpu.pipeline_mode<synchronous>, transform_indices = @transform_5, window_bounds = array<i64: 64, 128>}, {pipeline_mode = #tpu.pipeline_mode<synchronous>, transform_indices = @transform_6, window_bounds = array<i64: 1, 128>}, {transform_indices = @transform_7, window_bounds = array<i64: 8, 128>}]} {
    %c0 = arith.constant 0 : index
    %c0_0 = arith.constant 0 : index
    %0 = vector.load %arg1[%c0, %c0_0] : memref<8x8xf32, #tpu.memory_space<vmem>>, vector<8x8xf32>
    %c0_1 = arith.constant 0 : index
    %c0_2 = arith.constant 0 : index
    %1 = vector.load %arg2[%c0_1, %c0_2] : memref<8x64xf32, #tpu.memory_space<vmem>>, vector<8x64xf32>
    %cst = arith.constant dense<0.000000e+00> : vector<8x64xf32>
    %2 = tpu.matmul %0, %1, %cst {dimension_numbers = #tpu.dot_dimension_numbers<[1], [0], [0], [1], [0, 0, 1, 1], [], []>} : vector<8x8xf32>, vector<8x64xf32>, vector<8x64xf32> -> vector<8x64xf32>
    %c0_3 = arith.constant 0 : index
    %c0_4 = arith.constant 0 : index
    %3 = vector.load %arg3[%c0_3, %c0_4] : memref<1x64xf32, #tpu.memory_space<vmem>>, vector<1x64xf32>
    %4 = vector.broadcast %3 : vector<1x64xf32> to vector<8x64xf32>
    %5 = arith.addf %2, %4 : vector<8x64xf32>
    %cst_5 = arith.constant 0.000000e+00 : f32
    %6 = vector.broadcast %cst_5 : f32 to vector<8x64xf32>
    %7 = arith.maximumf %5, %6 : vector<8x64xf32>
    %c0_6 = arith.constant 0 : index
    %c0_7 = arith.constant 0 : index
    %8 = vector.load %arg4[%c0_6, %c0_7] : memref<64x64xf32, #tpu.memory_space<vmem>>, vector<64x64xf32>
    %cst_8 = arith.constant dense<0.000000e+00> : vector<8x64xf32>
    %9 = tpu.matmul %7, %8, %cst_8 {dimension_numbers = #tpu.dot_dimension_numbers<[1], [0], [0], [1], [0, 0, 1, 1], [], []>} : vector<8x64xf32>, vector<64x64xf32>, vector<8x64xf32> -> vector<8x64xf32>
    %c0_9 = arith.constant 0 : index
    %c0_10 = arith.constant 0 : index
    %10 = vector.load %arg5[%c0_9, %c0_10] : memref<1x64xf32, #tpu.memory_space<vmem>>, vector<1x64xf32>
    %11 = vector.broadcast %10 : vector<1x64xf32> to vector<8x64xf32>
    %12 = arith.addf %9, %11 : vector<8x64xf32>
    %cst_11 = arith.constant 0.000000e+00 : f32
    %13 = vector.broadcast %cst_11 : f32 to vector<8x64xf32>
    %14 = arith.maximumf %12, %13 : vector<8x64xf32>
    %c0_12 = arith.constant 0 : index
    %c0_13 = arith.constant 0 : index
    %15 = vector.load %arg6[%c0_12, %c0_13] : memref<64x128xf32, #tpu.memory_space<vmem>>, vector<64x128xf32>
    %cst_14 = arith.constant dense<0.000000e+00> : vector<8x128xf32>
    %16 = tpu.matmul %14, %15, %cst_14 {dimension_numbers = #tpu.dot_dimension_numbers<[1], [0], [0], [1], [0, 0, 1, 1], [], []>} : vector<8x64xf32>, vector<64x128xf32>, vector<8x128xf32> -> vector<8x128xf32>
    %c0_15 = arith.constant 0 : index
    %c0_16 = arith.constant 0 : index
    %17 = vector.load %arg7[%c0_15, %c0_16] : memref<1x128xf32, #tpu.memory_space<vmem>>, vector<1x128xf32>
    %18 = vector.broadcast %17 : vector<1x128xf32> to vector<8x128xf32>
    %19 = arith.addf %16, %18 : vector<8x128xf32>
    %20 = tpu.iota {dimensions = array<i32: 1>} : vector<8x128xi32>
    %c4_i32 = arith.constant 4 : i32
    %21 = vector.broadcast %c4_i32 : i32 to vector<8x128xi32>
    %22 = arith.cmpi sge, %20, %21 : vector<8x128xi32>
    %c8_i32 = arith.constant 8 : i32
    %23 = vector.broadcast %c8_i32 : i32 to vector<8x128xi32>
    %24 = arith.cmpi slt, %20, %23 : vector<8x128xi32>
    %25 = arith.andi %22, %24 : vector<8x128xi1>
    %26 = math.tanh %19 : vector<8x128xf32>
    %cst_17 = arith.constant 3.500000e+00 : f32
    %27 = vector.broadcast %cst_17 : f32 to vector<8x128xf32>
    %28 = arith.mulf %26, %27 : vector<8x128xf32>
    %cst_18 = arith.constant -1.500000e+00 : f32
    %29 = vector.broadcast %cst_18 : f32 to vector<8x128xf32>
    %30 = arith.addf %28, %29 : vector<8x128xf32>
    %31 = arith.select %25, %30, %19 : vector<8x128xi1>, vector<8x128xf32>
    %c0_19 = arith.constant 0 : index
    %c0_20 = arith.constant 0 : index
    %32 = vector.load %arg8[%c0_19, %c0_20] : memref<8x128xf32, #tpu.memory_space<vmem>>, vector<8x128xf32>
    tpu.vector_store %arg8[%c0_19, %c0_20], %31 {strides = array<i32>} : memref<8x128xf32, #tpu.memory_space<vmem>>, vector<8x128xf32>,
    return
  }
  func.func @transform_0(%arg0: i32) -> (i32, i32) {
    %c0_i32 = arith.constant 0 : i32
    %c0_i32_0 = arith.constant 0 : i32
    return %arg0, %c0_i32 : i32, i32
  }
  func.func @transform_1(%arg0: i32) -> (i32, i32) {
    %c0_i32 = arith.constant 0 : i32
    %c0_i32_0 = arith.constant 0 : i32
    %c0_i32_1 = arith.constant 0 : i32
    return %c0_i32, %c0_i32_0 : i32, i32
  }
  func.func @transform_2(%arg0: i32) -> (i32, i32) {
    %c0_i32 = arith.constant 0 : i32
    %c0_i32_0 = arith.constant 0 : i32
    %c0_i32_1 = arith.constant 0 : i32
    return %c0_i32, %c0_i32_0 : i32, i32
  }
  func.func @transform_3(%arg0: i32) -> (i32, i32) {
    %c0_i32 = arith.constant 0 : i32
    %c0_i32_0 = arith.constant 0 : i32
    %c0_i32_1 = arith.constant 0 : i32
    return %c0_i32, %c0_i32_0 : i32, i32
  }
  func.func @transform_4(%arg0: i32) -> (i32, i32) {
    %c0_i32 = arith.constant 0 : i32
    %c0_i32_0 = arith.constant 0 : i32
    %c0_i32_1 = arith.constant 0 : i32
    return %c0_i32, %c0_i32_0 : i32, i32
  }
  func.func @transform_5(%arg0: i32) -> (i32, i32) {
    %c0_i32 = arith.constant 0 : i32
    %c0_i32_0 = arith.constant 0 : i32
    %c0_i32_1 = arith.constant 0 : i32
    return %c0_i32, %c0_i32_0 : i32, i32
  }
  func.func @transform_6(%arg0: i32) -> (i32, i32) {
    %c0_i32 = arith.constant 0 : i32
    %c0_i32_0 = arith.constant 0 : i32
    %c0_i32_1 = arith.constant 0 : i32
    return %c0_i32, %c0_i32_0 : i32, i32
  }
  func.func @transform_7(%arg0: i32) -> (i32, i32) {
    %c0_i32 = arith.constant 0 : i32
    %c0_i32_0 = arith.constant 0 : i32
    return %arg0, %c0_i32 : i32, i32
  }
}

</mosaic_0001>

<llo_original>
// kernel: tpu_custom_call.1
$region0: #{tpu_custom_call.1}
  #allocation0 [shape = 'u32[]', space=smem, size = 0x4, offset = 0x4, fixed_abs, tag = 'smem constant byte address 0x4 - core index']
  #allocation1 [shape = 'u32[144,128]{1,0:T(1,128)}', space=vmem, size = 0x12000, scoped, tag = 'internal scratch']
  %s0 = inlined_call_operand.hbm [shape: f32[8,8], index: 0, kind: input, shape index: {}]
  %s1 = inlined_call_operand.hbm [shape: f32[8,64], index: 1, kind: input, shape index: {}]
  %s2 = inlined_call_operand.vmem [shape: f32[1,64], index: 2, kind: input, shape index: {}]
  %s3 = inlined_call_operand.hbm [shape: f32[64,64], index: 3, kind: input, shape index: {}]
  %s4 = inlined_call_operand.vmem [shape: f32[1,64], index: 4, kind: input, shape index: {}]
  %s5 = inlined_call_operand.hbm [shape: f32[64,128], index: 5, kind: input, shape index: {}]
  %s6 = inlined_call_operand.vmem [shape: f32[1,128], index: 6, kind: input, shape index: {}]
  %s7 = inlined_call_operand.hbm [shape: f32[8,128], index: 7, kind: output, shape index: {}]
  %s8 = sld [smem:[#allocation0]]
  $region54: #{tpu_custom_call.1} parent=0
    _
  %s10 = ssub.s32 1, %s8
  %s11 = scalar_select 0, %s10, %s8
  $region1: #{tpu_custom_call.1} parent=0
    #allocation2 [shape = 'u8[4096]{0}', space=vmem, size = 0x1000, scoped, tag = 'input window, operand 0, single buffered']
    #allocation3 [shape = 's32[1]{0}', space=sflag, size = 0x4, scoped, tag = 'scoped memory for tpu_custom_call.1']
    #allocation4 [shape = 's32[1]{0}', space=sflag, size = 0x4, scoped, tag = 'scoped memory for tpu_custom_call.1']
    #allocation5 [shape = 'u8[4096]{0}', space=vmem, size = 0x1000, scoped, tag = 'input window, operand 1, single buffered']
    #allocation6 [shape = 's32[1]{0}', space=sflag, size = 0x4, scoped, tag = 'scoped memory for tpu_custom_call.1']
    #allocation7 [shape = 'u8[32768]{0}', space=vmem, size = 0x8000, scoped, tag = 'input window, operand 3, single buffered']
    #allocation8 [shape = 'u8[32768]{0}', space=vmem, size = 0x8000, scoped, tag = 'input window, operand 5, single buffered']
    #allocation9 [shape = 's32[1]{0}', space=sflag, size = 0x4, scoped, tag = 'scoped memory for tpu_custom_call.1']
    #allocation10 [shape = 'u8[4096]{0}', space=vmem, size = 0x1000, scoped, tag = 'output window, operand 0, single buffered']
    %12 = vsyncpa [#allocation3], 0
    %13 = vsyncpa [#allocation6], 0
    %14 = vsyncpa [#allocation9], 0
    %15 = vsyncpa [#allocation4], 0
    // Predicated region
    $region2: #{tpu_custom_call.1} parent=1 // pred_check
      _
    $region3: #{tpu_custom_call.1} parent=1 // pred_check_branch
      %17 = sbr.rel (0) target = $region5
    $region4: #{tpu_custom_call.1} parent=1 // pred_region
      %s19 = ssub.s32 128, 128
      %20 = vsyncadd [#allocation3], %s19
      %s22 = sshll.u32 [#allocation2], 4
      %s23 = int_to_ptr.vmem [resolvable:$true] %s22
      %25 = dma.hbm_to_vmem [thread:$0]  %s0, 128, %s23, [#allocation3]
    $region5: #{tpu_custom_call.1} parent=1 // pred_fallthru
      _
    // Predicated region
    $region6: #{tpu_custom_call.1} parent=1 // pred_check
      _
    $region7: #{tpu_custom_call.1} parent=1 // pred_check_branch
      %27 = sbr.rel (0) target = $region9
    $region8: #{tpu_custom_call.1} parent=1 // pred_region
      %s29 = ssub.s32 128, 128
      %30 = vsyncadd [#allocation6], %s29
      %s32 = sshll.u32 [#allocation5], 4
      %s33 = int_to_ptr.vmem [resolvable:$true] %s32
      %35 = dma.hbm_to_vmem [thread:$0]  %s1, 128, %s33, [#allocation6]
    $region9: #{tpu_custom_call.1} parent=1 // pred_fallthru
      _
    // Predicated region
    $region10: #{tpu_custom_call.1} parent=1 // pred_check
      _
    $region11: #{tpu_custom_call.1} parent=1 // pred_check_branch
      %37 = sbr.rel (0) target = $region13
    $region12: #{tpu_custom_call.1} parent=1 // pred_region
      _
    $region13: #{tpu_custom_call.1} parent=1 // pred_fallthru
      _
    // Predicated region
    $region14: #{tpu_custom_call.1} parent=1 // pred_check
      _
    $region15: #{tpu_custom_call.1} parent=1 // pred_check_branch
      %39 = sbr.rel (0) target = $region17
    $region16: #{tpu_custom_call.1} parent=1 // pred_region
      %s41 = ssub.s32 1024, 1024
      %42 = vsyncadd [#allocation6], %s41
      %s43 = sshll.u32 [#allocation7], 4
      %s44 = int_to_ptr.vmem [resolvable:$true] %s43
      %49 = dma.hbm_to_vmem [thread:$0]  %s3, 1024, %s44, [#allocation6], 128, 128, 8
    $region17: #{tpu_custom_call.1} parent=1 // pred_fallthru
      _
    // Predicated region
    $region18: #{tpu_custom_call.1} parent=1 // pred_check
      _
    $region19: #{tpu_custom_call.1} parent=1 // pred_check_branch
      %51 = sbr.rel (0) target = $region21
    $region20: #{tpu_custom_call.1} parent=1 // pred_region
      _
    $region21: #{tpu_custom_call.1} parent=1 // pred_fallthru
      _
    // Predicated region
    $region22: #{tpu_custom_call.1} parent=1 // pred_check
      _
    $region23: #{tpu_custom_call.1} parent=1 // pred_check_branch
      %53 = sbr.rel (0) target = $region25
    $region24: #{tpu_custom_call.1} parent=1 // pred_region
      %s55 = ssub.s32 1024, 1024
      %56 = vsyncadd [#allocation9], %s55
      %s57 = sshll.u32 [#allocation8], 4
      %s58 = int_to_ptr.vmem [resolvable:$true] %s57
      %63 = dma.hbm_to_vmem [thread:$0]  %s5, 1024, %s58, [#allocation9], 128, 128, 8
    $region25: #{tpu_custom_call.1} parent=1 // pred_fallthru
      _
    // Predicated region
    $region26: #{tpu_custom_call.1} parent=1 // pred_check
      _
    $region27: #{tpu_custom_call.1} parent=1 // pred_check_branch
      %65 = sbr.rel (0) target = $region29
    $region28: #{tpu_custom_call.1} parent=1 // pred_region
      _
    $region29: #{tpu_custom_call.1} parent=1 // pred_fallthru
      _
    // Predicated region
    $region30: #{tpu_custom_call.1} parent=1 // pred_check
      _
    $region31: #{tpu_custom_call.1} parent=1 // pred_check_branch
      %67 = sbr.rel (0) target = $region33
    $region32: #{tpu_custom_call.1} parent=1 // pred_region
      %68 = dma.done [#allocation3], 128
    $region33: #{tpu_custom_call.1} parent=1 // pred_fallthru
      _
    // Predicated region
    $region34: #{tpu_custom_call.1} parent=1 // pred_check
      _
    $region35: #{tpu_custom_call.1} parent=1 // pred_check_branch
      %70 = sbr.rel (0) target = $region37
    $region36: #{tpu_custom_call.1} parent=1 // pred_region
      %71 = dma.done [#allocation6], 128
    $region37: #{tpu_custom_call.1} parent=1 // pred_fallthru
      _
    // Predicated region
    $region38: #{tpu_custom_call.1} parent=1 // pred_check
      _
    $region39: #{tpu_custom_call.1} parent=1 // pred_check_branch
      %73 = sbr.rel (0) target = $region41
    $region40: #{tpu_custom_call.1} parent=1 // pred_region
      %74 = dma.done [#allocation6], 1024
    $region41: #{tpu_custom_call.1} parent=1 // pred_fallthru
      _
    // Predicated region
    $region42: #{tpu_custom_call.1} parent=1 // pred_check
      _
    $region43: #{tpu_custom_call.1} parent=1 // pred_check_branch
      %76 = sbr.rel (0) target = $region45
    $region44: #{tpu_custom_call.1} parent=1 // pred_region
      %77 = dma.done [#allocation9], 1024
    $region45: #{tpu_custom_call.1} parent=1 // pred_fallthru
      _
    %v78 = vld [vmem:[#allocation2] sm:$0xff]
    %v79 = vld [vmem:[#allocation5] sm:$0xff]
    %v80 = vld [vmem:[%s2] sm:$0x1]
    %v82 = vlaneseq
    %v83 = vshrl.u32 %v82, 7
    %v84 = vsub.s32 0, %v83
    %v85 = vrot.slane %v80, %v84
    %vm87 = vcmask 64512
    %v89 = vsel %vm87, %v78, 0
    %91 = vmatprep.subr.mxu0 0.0
    %92 = vmatpush1.msra.mxu0 %v79
    %93 = vmatprep.subr.mxu0 0.0
    %94 = vmatpush1.msra.mxu0 0.0
    %95 = vmatprep.subr.mxu0 0.0
    %96 = vmatpush1.msra.mxu0 0.0
    %97 = vmatprep.subr.mxu0 0.0
    %98 = vmatpush1.msra.mxu0 0.0
    %99 = vmatprep.subr.mxu0 0.0
    %100 = vmatpush1.msra.mxu0 0.0
    %101 = vmatprep.subr.mxu0 0.0
    %102 = vmatpush1.msra.mxu0 0.0
    %103 = vmatprep.subr.mxu0 0.0
    %104 = vmatpush1.msra.mxu0 0.0
    %105 = vmatprep.subr.mxu0 0.0
    %106 = vmatpush1.msra.mxu0 0.0
    %107 = vmatprep.subr.mxu0 0.0
    %108 = vmatpush1.msra.mxu0 0.0
    %109 = vmatprep.subr.mxu0 0.0
    %110 = vmatpush1.msra.mxu0 0.0
    %111 = vmatprep.subr.mxu0 0.0
    %112 = vmatpush1.msra.mxu0 0.0
    %113 = vmatprep.subr.mxu0 0.0
    %114 = vmatpush1.msra.mxu0 0.0
    %115 = vmatprep.subr.mxu0 0.0
    %116 = vmatpush1.msra.mxu0 0.0
    %117 = vmatprep.subr.mxu0 0.0
    %118 = vmatpush1.msra.mxu0 0.0
    %119 = vmatprep.subr.mxu0 0.0
    %120 = vmatpush1.msra.mxu0 0.0
    %121 = vmatprep.subr.mxu0 0.0
    %122 = vmatpush1.msra.mxu0 0.0
    %123 = vmatprep.subr.mxu0 0.0
    %124 = vmatpush1.msra.mxu0 0.0
    %125 = vmatprep.subr.mxu0 0.0
    %126 = vmatpush1.msra.mxu0 0.0
    %127 = vmatprep.subr.mxu0 0.0
    %128 = vmatpush1.msra.mxu0 0.0
    %129 = vmatprep.subr.mxu0 0.0
    %130 = vmatpush1.msra.mxu0 0.0
    %131 = vmatprep.subr.mxu0 0.0
    %132 = vmatpush1.msra.mxu0 0.0
    %133 = vmatprep.subr.mxu0 0.0
    %134 = vmatpush1.msra.mxu0 0.0
    %135 = vmatprep.subr.mxu0 0.0
    %136 = vmatpush1.msra.mxu0 0.0
    %137 = vmatprep.subr.mxu0 0.0
    %138 = vmatpush1.msra.mxu0 0.0
    %139 = vmatprep.subr.mxu0 0.0
    %140 = vmatpush1.msra.mxu0 0.0
    %141 = vmatprep.subr.mxu0 0.0
    %142 = vmatpush1.msra.mxu0 0.0
    %143 = vmatprep.subr.mxu0 0.0
    %144 = vmatpush1.msra.mxu0 0.0
    %145 = vmatprep.subr.mxu0 0.0
    %146 = vmatpush1.msra.mxu0 0.0
    %147 = vmatprep.subr.mxu0 0.0
    %148 = vmatpush1.msra.mxu0 0.0
    %149 = vmatprep.subr.mxu0 0.0
    %150 = vmatpush1.msra.mxu0 0.0
    %151 = vmatprep.subr.mxu0 0.0
    %152 = vmatpush1.msra.mxu0 0.0
    %153 = vmatprep.subr.mxu0 0.0
    %154 = vmatpush1.msra.mxu0 0.0
    %155 = vmatprep.mubr.f32.mxu0 0.0
    %156 = vmatmul.mubr.f32.gmra.mrb[0].mxu0 %v89
    %v157 = vpop.f32.mrb[0].mxu0
    %v158 = vadd.f32 %v85, %v157
    %v159 = vpop.f32.mrb[0].mxu0
    %160 = vdwg.mxu0
    %v161 = vmax.f32 %v158, 0.0
    %v162 = vld [vmem:[#allocation7] sm:$0xff]
    %v163 = vld [vmem:[#allocation7 + $0x8] sm:$0xff]
    %v164 = vld [vmem:[#allocation7 + $0x10] sm:$0xff]
    %v165 = vld [vmem:[#allocation7 + $0x18] sm:$0xff]
    %v166 = vld [vmem:[#allocation7 + $0x20] sm:$0xff]
    %v167 = vld [vmem:[#allocation7 + $0x28] sm:$0xff]
    %v168 = vld [vmem:[#allocation7 + $0x30] sm:$0xff]
    %v169 = vld [vmem:[#allocation7 + $0x38] sm:$0xff]
    %v170 = vld [vmem:[%s4] sm:$0x1]
    %v172 = vlaneseq
    %v173 = vshrl.u32 %v172, 7
    %v174 = vsub.s32 0, %v173
    %v175 = vrot.slane %v170, %v174
    %vm177 = vcmask 523264
    %v179 = vsel %vm177, %v161, 0
    %181 = vmatprep.subr.mxu0 0.0
    %182 = vmatpush1.msra.mxu0 %v162
    %183 = vmatprep.subr.mxu0 0.0
    %184 = vmatpush1.msra.mxu0 %v163
    %185 = vmatprep.subr.mxu0 0.0
    %186 = vmatpush1.msra.mxu0 %v164
    %187 = vmatprep.subr.mxu0 0.0
    %188 = vmatpush1.msra.mxu0 %v165
    %189 = vmatprep.subr.mxu0 0.0
    %190 = vmatpush1.msra.mxu0 %v166
    %191 = vmatprep.subr.mxu0 0.0
    %192 = vmatpush1.msra.mxu0 %v167
    %193 = vmatprep.subr.mxu0 0.0
    %194 = vmatpush1.msra.mxu0 %v168
    %195 = vmatprep.subr.mxu0 0.0
    %196 = vmatpush1.msra.mxu0 %v169
    %197 = vmatprep.subr.mxu0 0.0
    %198 = vmatpush1.msra.mxu0 0.0
    %199 = vmatprep.subr.mxu0 0.0
    %200 = vmatpush1.msra.mxu0 0.0
    %201 = vmatprep.subr.mxu0 0.0
    %202 = vmatpush1.msra.mxu0 0.0
    %203 = vmatprep.subr.mxu0 0.0
    %204 = vmatpush1.msra.mxu0 0.0
    %205 = vmatprep.subr.mxu0 0.0
    %206 = vmatpush1.msra.mxu0 0.0
    %207 = vmatprep.subr.mxu0 0.0
    %208 = vmatpush1.msra.mxu0 0.0
    %209 = vmatprep.subr.mxu0 0.0
    %210 = vmatpush1.msra.mxu0 0.0
    %211 = vmatprep.subr.mxu0 0.0
    %212 = vmatpush1.msra.mxu0 0.0
    %213 = vmatprep.subr.mxu0 0.0
    %214 = vmatpush1.msra.mxu0 0.0
    %215 = vmatprep.subr.mxu0 0.0
    %216 = vmatpush1.msra.mxu0 0.0
    %217 = vmatprep.subr.mxu0 0.0
    %218 = vmatpush1.msra.mxu0 0.0
    %219 = vmatprep.subr.mxu0 0.0
    %220 = vmatpush1.msra.mxu0 0.0
    %221 = vmatprep.subr.mxu0 0.0
    %222 = vmatpush1.msra.mxu0 0.0
    %223 = vmatprep.subr.mxu0 0.0
    %224 = vmatpush1.msra.mxu0 0.0
    %225 = vmatprep.subr.mxu0 0.0
    %226 = vmatpush1.msra.mxu0 0.0
    %227 = vmatprep.subr.mxu0 0.0
    %228 = vmatpush1.msra.mxu0 0.0
    %229 = vmatprep.subr.mxu0 0.0
    %230 = vmatpush1.msra.mxu0 0.0
    %231 = vmatprep.subr.mxu0 0.0
    %232 = vmatpush1.msra.mxu0 0.0
    %233 = vmatprep.subr.mxu0 0.0
    %234 = vmatpush1.msra.mxu0 0.0
    %235 = vmatprep.subr.mxu0 0.0
    %236 = vmatpush1.msra.mxu0 0.0
    %237 = vmatprep.subr.mxu0 0.0
    %238 = vmatpush1.msra.mxu0 0.0
    %239 = vmatprep.subr.mxu0 0.0
    %240 = vmatpush1.msra.mxu0 0.0
    %241 = vmatprep.subr.mxu0 0.0
    %242 = vmatpush1.msra.mxu0 0.0
    %243 = vmatprep.subr.mxu0 0.0
    %244 = vmatpush1.msra.mxu0 0.0
    %245 = vmatprep.mubr.f32.mxu0 0.0
    %246 = vmatmul.mubr.f32.gmra.mrb[0].mxu0 %v179
    %v247 = vpop.f32.mrb[0].mxu0
    %v248 = vadd.f32 %v175, %v247
    %v249 = vpop.f32.mrb[0].mxu0
    %250 = vdwg.mxu0
    %v251 = vmax.f32 %v248, 0.0
    %v252 = vld [vmem:[#allocation8] sm:$0xff]
    %v253 = vld [vmem:[#allocation8 + $0x8] sm:$0xff]
    %v254 = vld [vmem:[#allocation8 + $0x10] sm:$0xff]
    %v255 = vld [vmem:[#allocation8 + $0x18] sm:$0xff]
    %v256 = vld [vmem:[#allocation8 + $0x20] sm:$0xff]
    %v257 = vld [vmem:[#allocation8 + $0x28] sm:$0xff]
    %v258 = vld [vmem:[#allocation8 + $0x30] sm:$0xff]
    %v259 = vld [vmem:[#allocation8 + $0x38] sm:$0xff]
    %v260 = vld [vmem:[%s6] sm:$0x1]
    %v262 = vlaneseq
    %v263 = vshrl.u32 %v262, 7
    %v264 = vsub.s32 0, %v263
    %v265 = vrot.slane %v260, %v264
    %v268 = vsel %vm177, %v251, 0
    %270 = vmatprep.subr.mxu0 0.0
    %271 = vmatpush1.msra.mxu0 %v252
    %272 = vmatprep.subr.mxu0 0.0
    %273 = vmatpush1.msra.mxu0 %v253
    %274 = vmatprep.subr.mxu0 0.0
    %275 = vmatpush1.msra.mxu0 %v254
    %276 = vmatprep.subr.mxu0 0.0
    %277 = vmatpush1.msra.mxu0 %v255
    %278 = vmatprep.subr.mxu0 0.0
    %279 = vmatpush1.msra.mxu0 %v256
    %280 = vmatprep.subr.mxu0 0.0
    %281 = vmatpush1.msra.mxu0 %v257
    %282 = vmatprep.subr.mxu0 0.0
    %283 = vmatpush1.msra.mxu0 %v258
    %284 = vmatprep.subr.mxu0 0.0
    %285 = vmatpush1.msra.mxu0 %v259
    %286 = vmatprep.subr.mxu0 0.0
    %287 = vmatpush1.msra.mxu0 0.0
    %288 = vmatprep.subr.mxu0 0.0
    %289 = vmatpush1.msra.mxu0 0.0
    %290 = vmatprep.subr.mxu0 0.0
    %291 = vmatpush1.msra.mxu0 0.0
    %292 = vmatprep.subr.mxu0 0.0
    %293 = vmatpush1.msra.mxu0 0.0
    %294 = vmatprep.subr.mxu0 0.0
    %295 = vmatpush1.msra.mxu0 0.0
    %296 = vmatprep.subr.mxu0 0.0
    %297 = vmatpush1.msra.mxu0 0.0
    %298 = vmatprep.subr.mxu0 0.0
    %299 = vmatpush1.msra.mxu0 0.0
    %300 = vmatprep.subr.mxu0 0.0
    %301 = vmatpush1.msra.mxu0 0.0
    %302 = vmatprep.subr.mxu0 0.0
    %303 = vmatpush1.msra.mxu0 0.0
    %304 = vmatprep.subr.mxu0 0.0
    %305 = vmatpush1.msra.mxu0 0.0
    %306 = vmatprep.subr.mxu0 0.0
    %307 = vmatpush1.msra.mxu0 0.0
    %308 = vmatprep.subr.mxu0 0.0
    %309 = vmatpush1.msra.mxu0 0.0
    %310 = vmatprep.subr.mxu0 0.0
    %311 = vmatpush1.msra.mxu0 0.0
    %312 = vmatprep.subr.mxu0 0.0
    %313 = vmatpush1.msra.mxu0 0.0
    %314 = vmatprep.subr.mxu0 0.0
    %315 = vmatpush1.msra.mxu0 0.0
    %316 = vmatprep.subr.mxu0 0.0
    %317 = vmatpush1.msra.mxu0 0.0
    %318 = vmatprep.subr.mxu0 0.0
    %319 = vmatpush1.msra.mxu0 0.0
    %320 = vmatprep.subr.mxu0 0.0
    %321 = vmatpush1.msra.mxu0 0.0
    %322 = vmatprep.subr.mxu0 0.0
    %323 = vmatpush1.msra.mxu0 0.0
    %324 = vmatprep.subr.mxu0 0.0
    %325 = vmatpush1.msra.mxu0 0.0
    %326 = vmatprep.subr.mxu0 0.0
    %327 = vmatpush1.msra.mxu0 0.0
    %328 = vmatprep.subr.mxu0 0.0
    %329 = vmatpush1.msra.mxu0 0.0
    %330 = vmatprep.subr.mxu0 0.0
    %331 = vmatpush1.msra.mxu0 0.0
    %332 = vmatprep.subr.mxu0 0.0
    %333 = vmatpush1.msra.mxu0 0.0
    %334 = vmatprep.mubr.f32.mxu0 0.0
    %335 = vmatmul.mubr.f32.gmra.mrb[0].mxu0 %v268
    %v336 = vpop.f32.mrb[0].mxu0
    %v337 = vadd.f32 %v265, %v336
    %v338 = vpop.f32.mrb[0].mxu0
    %339 = vdwg.mxu0
    %v340 = vlaneseq
    %v341 = vand.u32 %v340, 127
    %vm342 = vcmp.ge.s32.totalorder %v341, 4
    %vm343 = vcmp.lt.s32.totalorder %v341, 8
    %vm344 = vmand %vm342, %vm343
    %v345 = vtanh.pop %v337
    %v346 = vmul.f32 %v345, 3.5
    %v347 = vadd.f32 %v346, -1.5
    %v348 = vsel %vm344, %v347, %v337
    %349 = vst [vmem:[#allocation10] sm:$0xff] %v348
    // Predicated region
    $region46: #{tpu_custom_call.1} parent=1 // pred_check
      _
    $region47: #{tpu_custom_call.1} parent=1 // pred_check_branch
      %351 = sbr.rel (0) target = $region49
    $region48: #{tpu_custom_call.1} parent=1 // pred_region
      %s353 = ssub.s32 128, 128
      %354 = vsyncadd [#allocation4], %s353
      %s356 = sshll.u32 [#allocation10], 4
      %s357 = int_to_ptr.vmem [resolvable:$true] %s356
      %359 = dma.vmem_to_hbm [thread:$0]  %s357, 128, %s7, [#allocation4]
    $region49: #{tpu_custom_call.1} parent=1 // pred_fallthru
      _
    // Predicated region
    $region50: #{tpu_custom_call.1} parent=1 // pred_check
      _
    $region51: #{tpu_custom_call.1} parent=1 // pred_check_branch
      %361 = sbr.rel (0) target = $region53
    $region52: #{tpu_custom_call.1} parent=1 // pred_region
      %362 = dma.done [#allocation4], 128
    $region53: #{tpu_custom_call.1} parent=1 // pred_fallthru
      _
    %363 = vsyncpa [#allocation3], 1
    %364 = vsyncpa [#allocation6], 1
    %365 = vsyncpa [#allocation9], 1
    %366 = vsyncpa [#allocation4], 1

</llo_original>
